<compile_context>
chip_gen: v7x
topology: tpu7x:2x2x1
jax: 0.10.0
libtpu: 0.0.40
codegen_flags: <defaults>
</compile_context>

<pallas_src>
import jax
import jax.numpy as jnp
from jax.experimental import pallas as pl
from jax.experimental.pallas import tpu as pltpu


def _quadratic_kernel(x_ref, o_ref):
    x = x_ref[...]
    # x * relu(x) == x * max(x, 0)
    o_ref[...] = x * jnp.maximum(x, jnp.zeros_like(x))


def _sublane(dtype):
    # Sublane packing multiple: f32 -> 8, bf16/f16 -> 16, int8/fp8 -> 32.
    return {4: 8, 2: 16, 1: 32}.get(jnp.dtype(dtype).itemsize, 8)


def quadratic_forward(
    x,
    *,
    max_block_bytes=4 * 1024 * 1024,   # ~4 MiB per block
    min_kernel_bytes=256 * 1024,       # below this, plain fused jnp is faster
    donate_input=False,
):
    """Elementwise x * relu(x) for any shape via a tiled Pallas TPU kernel."""
    orig_shape = x.shape
    dtype = x.dtype
    n = x.size
    itemsize = jnp.dtype(dtype).itemsize
    sub = _sublane(dtype)

    # Tiny inputs: pallas_call launch + relayout overhead exceeds kernel time.
    if n == 0 or n * itemsize < min_kernel_bytes:
        return x * jnp.maximum(x, jnp.zeros_like(x))

    # ---- choose a lane-dense 2-D view, avoiding extra HBM passes -----------
    pad = 0
    if (
        len(orig_shape) >= 2
        and orig_shape[-1] % 128 == 0
        and orig_shape[-1] * sub * itemsize <= max_block_bytes
    ):
        # Last dim already lane-aligned: collapse leading dims (cheap reshape).
        cols = orig_shape[-1]
        rows = n // cols
    else:
        # Flatten; pick the widest lane-aligned width that divides n so no
        # padding is needed.  Ragged n (n % 128 != 0) falls back to padding.
        cols = 1024
        for c in (1024, 512, 256, 128):
            if n % c == 0:
                cols = c
                break
        rows = pl.cdiv(n, cols)
        pad = rows * cols - n

    if pad == 0:
        x2d = x.reshape(rows, cols)
    else:
        # Zero padding is harmless: 0 * relu(0) == 0, and it is sliced off.
        x2d = jnp.pad(jnp.ravel(x), (0, pad)).reshape(rows, cols)

    # ---- block/grid selection ----------------------------------------------
    # Largest row count (multiple of the sublane packing) whose block fits the
    # per-block byte budget; a single full-array block for small inputs.
    max_rows = max(sub, (max_block_bytes // (cols * itemsize)) // sub * sub)
    block_rows = rows if rows <= max_rows else max_rows
    grid = (pl.cdiv(rows, block_rows),)

    out2d = pl.pallas_call(
        _quadratic_kernel,
        out_shape=jax.ShapeDtypeStruct((rows, cols), dtype),
        grid=grid,
        in_specs=[pl.BlockSpec((block_rows, cols), lambda i: (i, 0))],
        out_specs=pl.BlockSpec((block_rows, cols), lambda i: (i, 0)),
        compiler_params=pltpu.CompilerParams(
            dimension_semantics=("parallel",),
            # 4 buffers x <=4 MiB = ~16 MiB; 32 MiB is safe on v5e/v6e/v7x.
            vmem_limit_bytes=32 * 1024 * 1024,
        ),
        cost_estimate=pl.CostEstimate(
            flops=2 * rows * cols,
            transcendentals=0,
            bytes_accessed=2 * rows * cols * itemsize,  # bytes actually streamed
        ),
        input_output_aliases=({0: 0} if donate_input else {}),
    )(x2d)

    if pad == 0:
        return out2d.reshape(orig_shape)
    return out2d.reshape(-1)[:n].reshape(orig_shape)


def quadratic_reference(x):
    return x * jnp.maximum(x, 0.0)


if __name__ == "__main__":
    key = jax.random.PRNGKey(0)
    x = jax.random.normal(key, (2, 4, 16, 16), jnp.float32)

    # min_kernel_bytes=0 forces the Pallas path at this tiny demo size.
    out = quadratic_forward(x, min_kernel_bytes=0)
    out = jax.block_until_ready(out)

    ref = quadratic_reference(x)
    assert out.shape == x.shape and out.dtype == x.dtype
    assert jnp.allclose(out, ref, atol=1e-6, rtol=1e-6)

    print("KERNEL_OK")
</pallas_src>

<mosaic_0001>
module attributes {stable_mosaic.version = 11 : i64} {
  func.func @_quadratic_kernel(%arg0: i32, %arg1: memref<2x1024xf32, #tpu.memory_space<vmem>>, %arg2: memref<2x1024xf32, #tpu.memory_space<vmem>>) attributes {dimension_semantics = [#tpu.dimension_semantics<parallel>], iteration_bounds = array<i64: 1>, scalar_prefetch = 0 : i64, scratch_operands = 0 : i64, tpu.core_type = #tpu.core_type<tc>, window_params = [{transform_indices = @transform_0, window_bounds = array<i64: 2, 1024>}, {transform_indices = @transform_1, window_bounds = array<i64: 2, 1024>}]} {
    %c0 = arith.constant 0 : index
    %c0_0 = arith.constant 0 : index
    %0 = vector.load %arg1[%c0, %c0_0] : memref<2x1024xf32, #tpu.memory_space<vmem>>, vector<2x1024xf32>
    %cst = arith.constant 0.000000e+00 : f32
    %1 = vector.broadcast %cst : f32 to vector<2x1024xf32>
    %2 = arith.maximumf %0, %1 : vector<2x1024xf32>
    %3 = arith.mulf %0, %2 : vector<2x1024xf32>
    %c0_1 = arith.constant 0 : index
    %c0_2 = arith.constant 0 : index
    %4 = vector.load %arg2[%c0_1, %c0_2] : memref<2x1024xf32, #tpu.memory_space<vmem>>, vector<2x1024xf32>
    tpu.vector_store %arg2[%c0_1, %c0_2], %3 {strides = array<i32>} : memref<2x1024xf32, #tpu.memory_space<vmem>>, vector<2x1024xf32>,
    return
  }
  func.func @transform_0(%arg0: i32) -> (i32, i32) {
    %c0_i32 = arith.constant 0 : i32
    %c0_i32_0 = arith.constant 0 : i32
    return %arg0, %c0_i32 : i32, i32
  }
  func.func @transform_1(%arg0: i32) -> (i32, i32) {
    %c0_i32 = arith.constant 0 : i32
    %c0_i32_0 = arith.constant 0 : i32
    return %arg0, %c0_i32 : i32, i32
  }
}

</mosaic_0001>

<llo_original>
// kernel: tpu_custom_call.1
$region0: #{tpu_custom_call.1}
  #allocation0 [shape = 'u32[]', space=smem, size = 0x4, offset = 0x4, fixed_abs, tag = 'smem constant byte address 0x4 - core index']
  #allocation1 [shape = 'u32[144,128]{1,0:T(1,128)}', space=vmem, size = 0x12000, scoped, tag = 'internal scratch']
  %s0 = inlined_call_operand.hbm [shape: f32[2,1024], index: 0, kind: input, shape index: {}]
  %s1 = inlined_call_operand.hbm [shape: f32[2,1024], index: 1, kind: output, shape index: {}]
  %s2 = sld [smem:[#allocation0]]
  $region18: #{tpu_custom_call.1} parent=0
    _
  %s4 = ssub.s32 1, %s2
  %s5 = scalar_select 0, %s4, %s2
  $region1: #{tpu_custom_call.1} parent=0
    #allocation2 [shape = 'u8[8192]{0}', space=vmem, size = 0x2000, scoped, tag = 'input window, operand 0, single buffered']
    #allocation3 [shape = 's32[1]{0}', space=sflag, size = 0x4, scoped, tag = 'scoped memory for tpu_custom_call.1']
    #allocation4 [shape = 's32[1]{0}', space=sflag, size = 0x4, scoped, tag = 'scoped memory for tpu_custom_call.1']
    #allocation5 [shape = 'u8[8192]{0}', space=vmem, size = 0x2000, scoped, tag = 'output window, operand 0, single buffered']
    %6 = vsyncpa [#allocation3], 0
    %7 = vsyncpa [#allocation4], 0
    // Predicated region
    $region2: #{tpu_custom_call.1} parent=1 // pred_check
      _
    $region3: #{tpu_custom_call.1} parent=1 // pred_check_branch
      %9 = sbr.rel (0) target = $region5
    $region4: #{tpu_custom_call.1} parent=1 // pred_region
      %s11 = ssub.s32 256, 256
      %12 = vsyncadd [#allocation3], %s11
      %s14 = sshll.u32 [#allocation2], 4
      %s15 = int_to_ptr.vmem [resolvable:$true] %s14
      %17 = dma.hbm_to_vmem [thread:$0]  %s0, 256, %s15, [#allocation3]
    $region5: #{tpu_custom_call.1} parent=1 // pred_fallthru
      _
    // Predicated region
    $region6: #{tpu_custom_call.1} parent=1 // pred_check
      _
    $region7: #{tpu_custom_call.1} parent=1 // pred_check_branch
      %19 = sbr.rel (0) target = $region9
    $region8: #{tpu_custom_call.1} parent=1 // pred_region
      %20 = dma.done [#allocation3], 256
    $region9: #{tpu_custom_call.1} parent=1 // pred_fallthru
      _
    %v21 = vld [vmem:[#allocation2] sm:$0xff]
    %v22 = vld [vmem:[#allocation2 + $0x8] sm:$0xff]
    %v23 = vmax.f32 %v21, 0.0
    %v24 = vmax.f32 %v22, 0.0
    %v25 = vmul.f32 %v21, %v23
    %v26 = vmul.f32 %v22, %v24
    %27 = vst [vmem:[#allocation5] sm:$0xff] %v25
    %28 = vst [vmem:[#allocation5 + $0x8] sm:$0xff] %v26
    // Predicated region
    $region10: #{tpu_custom_call.1} parent=1 // pred_check
      _
    $region11: #{tpu_custom_call.1} parent=1 // pred_check_branch
      %30 = sbr.rel (0) target = $region13
    $region12: #{tpu_custom_call.1} parent=1 // pred_region
      %s32 = ssub.s32 256, 256
      %33 = vsyncadd [#allocation4], %s32
      %s35 = sshll.u32 [#allocation5], 4
      %s36 = int_to_ptr.vmem [resolvable:$true] %s35
      %38 = dma.vmem_to_hbm [thread:$0]  %s36, 256, %s1, [#allocation4]
    $region13: #{tpu_custom_call.1} parent=1 // pred_fallthru
      _
    // Predicated region
    $region14: #{tpu_custom_call.1} parent=1 // pred_check
      _
    $region15: #{tpu_custom_call.1} parent=1 // pred_check_branch
      %40 = sbr.rel (0) target = $region17
    $region16: #{tpu_custom_call.1} parent=1 // pred_region
      %41 = dma.done [#allocation4], 256
    $region17: #{tpu_custom_call.1} parent=1 // pred_fallthru
      _
    %42 = vsyncpa [#allocation3], 1
    %43 = vsyncpa [#allocation4], 1

</llo_original>
